<compile_context>
chip_gen: v5e
topology: v5e:2x2
jax: 0.10.0
libtpu: 0.0.40
codegen_flags: <defaults>
</compile_context>

<pallas_src>
import jax
import jax.numpy as jnp
import numpy as np
from jax.experimental import pallas as pl
from jax.experimental.pallas import tpu as pltpu


def _identity_kernel(x_ref, o_ref):
    # Streaming copy of one VMEM tile (no math; DMA-bound kernel).
    o_ref[...] = x_ref[...]


_LANE = 128
_SUBLANE = 8
_MAX_LANE_WIDTH = 8192                   # cap for the lane-dense reshape (tn)
_TARGET_TILE_BYTES = 4 * 1024 * 1024     # ~4 MiB per tile buffer: amortizes the
                                         # ~0.35us/step overhead, saturates HBM on v5e..v7x
_VMEM_LIMIT_BYTES = 48 * 1024 * 1024     # > in-flight (2 arrays x 2 bufs x 4 MiB),
                                         # safely under v7x's 64 MiB physical VMEM


def _pick_2d_view(shape, total):
    """Choose a 2D view (M, N). Prefer a lane-dense N (multiple of 128)."""
    if total % _LANE == 0:
        # Largest multiple of 128 that divides the element count, capped.
        n = _LANE
        cand = _LANE
        limit = min(total, _MAX_LANE_WIDTH)
        while cand <= limit:
            if total % cand == 0:
                n = cand
            cand += _LANE
        return total // n, n
    # Fallback: keep the original trailing dim (exact lane-dense reshape impossible).
    last = shape[-1] if len(shape) >= 1 else 1
    last = max(last, 1)
    return total // last, last


def _pick_tiles(m, n, itemsize):
    """Tile sizes: lane tile tn (full N or a 128-multiple chunk), sublane tile tm
    sized so a tile is ~_TARGET_TILE_BYTES. Ragged trailing blocks are handled by
    the cdiv grid, so tiles stay bounded for any input size."""
    if n <= _MAX_LANE_WIDTH:
        tn = n                      # full dim -> always a legal block shape
    else:
        tn = 2048                   # multiple of 128; trailing ragged block is fine
    rows = (_TARGET_TILE_BYTES // max(1, tn * itemsize)) // _SUBLANE * _SUBLANE
    rows = max(_SUBLANE, rows)
    if m <= rows:
        tm = m                      # full dim (legal even if not a multiple of 8)
    else:
        tm = rows                   # multiple of 8; cdiv grid handles the remainder
    return tm, tn


def identity(x: jax.Array) -> jax.Array:
    """Pallas implementation of IdentityModule.forward: returns x unchanged."""
    orig_shape = x.shape
    orig_dtype = x.dtype
    total = int(x.size)

    # Scalars / empty arrays: the identity is the input itself — no bytes to move.
    if x.ndim == 0 or total == 0:
        return x

    m, n = _pick_2d_view(orig_shape, total)
    x2d = x.reshape(m, n)
    itemsize = jnp.dtype(orig_dtype).itemsize
    tm, tn = _pick_tiles(m, n, itemsize)

    grid = (pl.cdiv(m, tm), pl.cdiv(n, tn))

    out2d = pl.pallas_call(
        _identity_kernel,
        out_shape=jax.ShapeDtypeStruct((m, n), orig_dtype),
        grid_spec=pltpu.PrefetchScalarGridSpec(
            num_scalar_prefetch=0,
            grid=grid,
            in_specs=[pl.BlockSpec((tm, tn), lambda i, j: (i, j))],
            out_specs=pl.BlockSpec((tm, tn), lambda i, j: (i, j)),
        ),
        compiler_params=pltpu.CompilerParams(
            dimension_semantics=("parallel", "parallel"),
            vmem_limit_bytes=_VMEM_LIMIT_BYTES,
        ),
        # Output aliases the (reshaped) input: under jit with a donated argument this
        # elides the extra HBM output buffer; otherwise XLA inserts a safe copy.
        input_output_aliases={0: 0},
    )(x2d)

    return out2d.reshape(orig_shape)


if __name__ == "__main__":
    key = jax.random.PRNGKey(0)
    k0, k1 = jax.random.split(key)

    # Small NCHW input consistent with the module: batch=2, channels=4, 16x16 spatial.
    x = jax.random.normal(k0, (2, 4, 16, 16), dtype=jnp.float32)
    x_host = np.asarray(x)  # host snapshot: comparison is robust to any buffer aliasing

    y = identity(x)
    jax.block_until_ready(y)

    assert y.shape == x_host.shape, (y.shape, x_host.shape)
    assert y.dtype == x.dtype, (y.dtype, x.dtype)
    assert np.array_equal(np.asarray(y), x_host), "identity output mismatch"

    # Also exercise the non-lane-dense fallback path (element count not a multiple of 128).
    x2 = jax.random.normal(k1, (3, 5, 7), dtype=jnp.float32)
    x2_host = np.asarray(x2)
    y2 = identity(x2)
    jax.block_until_ready(y2)
    assert y2.shape == x2_host.shape and y2.dtype == x2.dtype
    assert np.array_equal(np.asarray(y2), x2_host), "identity fallback mismatch"

    print("KERNEL_OK")
</pallas_src>

<mosaic_0001>
module attributes {stable_mosaic.version = 11 : i64} {
  func.func @_identity_kernel(%arg0: i32, %arg1: i32, %arg2: memref<1x2048xf32, #tpu.memory_space<vmem>>, %arg3: memref<1x2048xf32, #tpu.memory_space<vmem>>) attributes {dimension_semantics = [#tpu.dimension_semantics<parallel>, #tpu.dimension_semantics<parallel>], iteration_bounds = array<i64: 1, 1>, scalar_prefetch = 0 : i64, scratch_operands = 0 : i64, tpu.core_type = #tpu.core_type<tc>, window_params = [{transform_indices = @transform_0, window_bounds = array<i64: 1, 2048>}, {transform_indices = @transform_1, window_bounds = array<i64: 1, 2048>}]} {
    %c0 = arith.constant 0 : index
    %c0_0 = arith.constant 0 : index
    %0 = vector.load %arg2[%c0, %c0_0] : memref<1x2048xf32, #tpu.memory_space<vmem>>, vector<1x2048xf32>
    %c0_1 = arith.constant 0 : index
    %c0_2 = arith.constant 0 : index
    %1 = vector.load %arg3[%c0_1, %c0_2] : memref<1x2048xf32, #tpu.memory_space<vmem>>, vector<1x2048xf32>
    tpu.vector_store %arg3[%c0_1, %c0_2], %0 {strides = array<i32>} : memref<1x2048xf32, #tpu.memory_space<vmem>>, vector<1x2048xf32>,
    return
  }
  func.func @transform_0(%arg0: i32, %arg1: i32) -> (i32, i32) {
    %c0_i32 = arith.constant 0 : i32
    return %arg0, %arg1 : i32, i32
  }
  func.func @transform_1(%arg0: i32, %arg1: i32) -> (i32, i32) {
    %c0_i32 = arith.constant 0 : i32
    return %arg0, %arg1 : i32, i32
  }
}

</mosaic_0001>

<llo_original>
// kernel: tpu_custom_call.1
$region0: #{tpu_custom_call.1}
  #allocation0 [shape = 'u32[]', space=smem, size = 0x4, offset = 0x4, fixed_abs, tag = 'smem constant byte address 0x4 - core index']
  #allocation1 [shape = 'u32[72,128]{1,0:T(1,128)}', space=vmem, size = 0x9000, scoped, tag = 'internal scratch']
  %s0 = inlined_call_operand.hbm [shape: f32[1,2048], index: 0, kind: input, shape index: {}, may-alias: {0,1}]
  %s1 = inlined_call_operand.hbm [shape: f32[1,2048], index: 1, kind: output, shape index: {}, may-alias: {0,1}]
  %s2 = sld [smem:[#allocation0]]
  $region18: #{tpu_custom_call.1} parent=0
    _
  %s4 = ssub.s32 1, %s2
  %s5 = scalar_select 0, %s4, %s2
  $region1: #{tpu_custom_call.1} parent=0
    #allocation2 [shape = 'u8[8192]{0}', space=vmem, size = 0x2000, scoped, tag = 'input window, operand 0, single buffered']
    #allocation3 [shape = 's32[1]{0}', space=sflag, size = 0x4, scoped, tag = 'scoped memory for tpu_custom_call.1']
    #allocation4 [shape = 's32[1]{0}', space=sflag, size = 0x4, scoped, tag = 'scoped memory for tpu_custom_call.1']
    #allocation5 [shape = 'u8[8192]{0}', space=vmem, size = 0x2000, scoped, tag = 'output window, operand 0, single buffered']
    %6 = vsyncpa [#allocation3], 0
    %7 = vsyncpa [#allocation4], 0
    // Predicated region
    $region2: #{tpu_custom_call.1} parent=1 // pred_check
      _
    $region3: #{tpu_custom_call.1} parent=1 // pred_check_branch
      %9 = sbr.rel (0) target = $region5
    $region4: #{tpu_custom_call.1} parent=1 // pred_region
      %11 = vsyncadd [#allocation3], 0
      %s13 = sshll.u32 %s0, 4
      %s14 = int_to_ptr.hbm [resolvable:$true] %s13
      %s15 = sshll.u32 [#allocation2], 4
      %s16 = int_to_ptr.vmem [resolvable:$true] %s15
      %18 = dma.hbm_to_vmem [thread:$0]  %s14, 256, %s16, [#allocation3]
    $region5: #{tpu_custom_call.1} parent=1 // pred_fallthru
      _
    // Predicated region
    $region6: #{tpu_custom_call.1} parent=1 // pred_check
      _
    $region7: #{tpu_custom_call.1} parent=1 // pred_check_branch
      %20 = sbr.rel (0) target = $region9
    $region8: #{tpu_custom_call.1} parent=1 // pred_region
      %22 = dma.done [#allocation3], 256
    $region9: #{tpu_custom_call.1} parent=1 // pred_fallthru
      _
    %v23 = vld [vmem:[#allocation2] sm:$0xff]
    %v24 = vld [vmem:[#allocation2 + $0x8] sm:$0xff]
    %25 = vst [vmem:[#allocation5] sm:$0xff] %v23
    %26 = vst [vmem:[#allocation5 + $0x8] sm:$0xff] %v24
    // Predicated region
    $region10: #{tpu_custom_call.1} parent=1 // pred_check
      _
    $region11: #{tpu_custom_call.1} parent=1 // pred_check_branch
      %28 = sbr.rel (0) target = $region13
    $region12: #{tpu_custom_call.1} parent=1 // pred_region
      %30 = vsyncadd [#allocation4], 0
      %s32 = sshll.u32 [#allocation5], 4
      %s33 = int_to_ptr.vmem [resolvable:$true] %s32
      %s34 = sshll.u32 %s1, 4
      %s35 = int_to_ptr.hbm [resolvable:$true] %s34
      %37 = dma.vmem_to_hbm [thread:$0]  %s33, 256, %s35, [#allocation4]
    $region13: #{tpu_custom_call.1} parent=1 // pred_fallthru
      _
    // Predicated region
    $region14: #{tpu_custom_call.1} parent=1 // pred_check
      _
    $region15: #{tpu_custom_call.1} parent=1 // pred_check_branch
      %39 = sbr.rel (0) target = $region17
    $region16: #{tpu_custom_call.1} parent=1 // pred_region
      %41 = dma.done [#allocation4], 256
    $region17: #{tpu_custom_call.1} parent=1 // pred_fallthru
      _
    %42 = vsyncpa [#allocation3], 1
    %43 = vsyncpa [#allocation4], 1

</llo_original>
